<compile_context>
chip_gen: v6e
topology: v6e:2x2x1
jax: 0.10.0
libtpu: 0.0.40
codegen_flags: <defaults>
</compile_context>

<pallas_src>
import functools

import jax
import jax.numpy as jnp
import numpy as np
from jax.experimental import pallas as pl
from jax.experimental.pallas import tpu as pltpu


# ----------------------------------------------------------------------------
# Pallas kernel: fused 1x1conv+BN -> concat -> 3x3conv+BN+ReLU
# ----------------------------------------------------------------------------
def _fused_upconv_kernel(H, W, up_ref, dn_ref, mask_ref, upw_ref, upb_ref,
                         c1w_ref, c1b_ref, o_ref):
    # up_ref  : (1, Cin, HW)   from_up tile for one (plane, batch) image
    # dn_ref  : (1, Cd,  HW)   from_down tile
    # mask_ref: (9, HW)        per-tap border-validity mask (1.0 / 0.0)
    # upw_ref : (Cout, Cin)    1x1 conv weight, BN scale folded in
    # upb_ref : (Cout, 1)      folded BN shift of the 1x1 branch
    # c1w_ref : (Cout, 9*(Cout+Cd))  tap-major 3x3 weights, BN scale folded in
    # c1b_ref : (Cout, 1)      folded BN shift of conv1
    # o_ref   : (1, Cout, HW)  lane-dense output tile
    HW = H * W

    # 1x1 conv + BN: (Cout, Cin) @ (Cin, HW) -> (Cout, HW)
    up = jnp.dot(upw_ref[...], up_ref[0], preferred_element_type=jnp.float32)
    up = up + upb_ref[...]

    # channel concat (merge_mode='concat'): (2C, HW)
    cat = jnp.concatenate([up, dn_ref[0]], axis=0)

    # 3x3 taps via lane-axis rotation + border masks; tap t = (dy+1)*3 + (dx+1)
    taps = []
    t = 0
    for dy in (-1, 0, 1):
        for dx in (-1, 0, 1):
            off = dy * W + dx
            shifted = cat if off == 0 else pltpu.roll(cat, (-off) % HW, 1)
            taps.append(shifted * mask_ref[t:t + 1, :])
            t += 1
    stacked = jnp.concatenate(taps, axis=0)                  # (9*2C, HW)

    # 3x3 conv as one matmul, then folded BN shift + ReLU, lane-dense store.
    y = jnp.dot(c1w_ref[...], stacked, preferred_element_type=jnp.float32)
    y = y + c1b_ref[...]
    o_ref[0] = jnp.maximum(y, 0.0)


def fused_upconv(up_stack, dn_stack, tap_masks, up_w, up_b, c1_w, c1_b, H, W):
    """Runs the fused block for a stack of (plane, batch) images.

    up_stack: (N, Cin, H*W), dn_stack: (N, Cd, H*W)  -> (N, Cout, H*W)
    """
    N, Cin, HW = up_stack.shape
    Cd = dn_stack.shape[1]
    Cout = up_w.shape[0]
    kernel = functools.partial(_fused_upconv_kernel, H, W)
    return pl.pallas_call(
        kernel,
        out_shape=jax.ShapeDtypeStruct((N, Cout, HW), jnp.float32),
        grid=(N,),
        in_specs=[
            pl.BlockSpec((1, Cin, HW), lambda n: (n, 0, 0)),
            pl.BlockSpec((1, Cd, HW), lambda n: (n, 0, 0)),
            pl.BlockSpec((9, HW), lambda n: (0, 0)),
            pl.BlockSpec((Cout, Cin), lambda n: (0, 0)),
            pl.BlockSpec((Cout, 1), lambda n: (0, 0)),
            pl.BlockSpec((Cout, 9 * (Cout + Cd)), lambda n: (0, 0)),
            pl.BlockSpec((Cout, 1), lambda n: (0, 0)),
        ],
        out_specs=pl.BlockSpec((1, Cout, HW), lambda n: (n, 0, 0)),
        compiler_params=pltpu.CompilerParams(
            dimension_semantics=("parallel",)),
    )(up_stack, dn_stack, tap_masks, up_w, up_b, c1_w, c1_b)


@functools.lru_cache(maxsize=None)
def _tap_masks(H, W):
    """(9, H*W) float masks: 1.0 where the 3x3 tap stays inside the image."""
    yy, xx = np.mgrid[0:H, 0:W]
    masks = []
    for dy in (-1, 0, 1):
        for dx in (-1, 0, 1):
            m = ((yy + dy >= 0) & (yy + dy < H) &
                 (xx + dx >= 0) & (xx + dx < W))
            masks.append(m.reshape(-1))
    return jnp.asarray(np.stack(masks, 0).astype(np.float32))


# ----------------------------------------------------------------------------
# Parameter setup / BN folding (glue)
# ----------------------------------------------------------------------------
def _fold_bn(conv_bias, gamma, beta, mean, var, eps=1e-5):
    scale = gamma / jnp.sqrt(var + eps)
    shift = beta + scale * (conv_bias - mean)
    return scale, shift


def init_params(key, in_channels, out_channels):
    ks = jax.random.split(key, 12)
    p = {}
    # upconv_noup = Conv2d(in, out, k=1, bias=True) + BatchNorm2d(out)
    p["up_w_oihw"] = 0.2 * jax.random.normal(ks[0], (out_channels, in_channels, 1, 1), jnp.float32)
    p["up_b"] = 0.1 * jax.random.normal(ks[1], (out_channels,), jnp.float32)
    p["up_bn_gamma"] = 1.0 + 0.1 * jax.random.normal(ks[2], (out_channels,), jnp.float32)
    p["up_bn_beta"] = 0.1 * jax.random.normal(ks[3], (out_channels,), jnp.float32)
    p["up_bn_mean"] = 0.1 * jax.random.normal(ks[4], (out_channels,), jnp.float32)
    p["up_bn_var"] = 0.5 + jax.random.uniform(ks[5], (out_channels,), jnp.float32)
    # conv1 = Conv2d(2*out, out, k=3, pad=1, bias=True) + BatchNorm2d(out)
    p["c1_w_oihw"] = 0.1 * jax.random.normal(ks[6], (out_channels, 2 * out_channels, 3, 3), jnp.float32)
    p["c1_b"] = 0.1 * jax.random.normal(ks[7], (out_channels,), jnp.float32)
    p["c1_bn_gamma"] = 1.0 + 0.1 * jax.random.normal(ks[8], (out_channels,), jnp.float32)
    p["c1_bn_beta"] = 0.1 * jax.random.normal(ks[9], (out_channels,), jnp.float32)
    p["c1_bn_mean"] = 0.1 * jax.random.normal(ks[10], (out_channels,), jnp.float32)
    p["c1_bn_var"] = 0.5 + jax.random.uniform(ks[11], (out_channels,), jnp.float32)

    # Kernel-side layouts with eval-mode BN scales folded into the weights.
    up_scale, up_shift = _fold_bn(p["up_b"], p["up_bn_gamma"], p["up_bn_beta"],
                                  p["up_bn_mean"], p["up_bn_var"])
    c1_scale, c1_shift = _fold_bn(p["c1_b"], p["c1_bn_gamma"], p["c1_bn_beta"],
                                  p["c1_bn_mean"], p["c1_bn_var"])
    p["up_w_k"] = up_scale[:, None] * p["up_w_oihw"][:, :, 0, 0]      # (Cout, Cin)
    p["up_shift_k"] = up_shift[:, None]                               # (Cout, 1)
    # tap-major 3x3 weights: [o, (ky*3+kx)*2C + c] = w_oihw[o, c, ky, kx]
    w_tap = jnp.transpose(p["c1_w_oihw"], (0, 2, 3, 1))               # (Cout,3,3,2C)
    p["c1_w_k"] = c1_scale[:, None] * w_tap.reshape(out_channels, 9 * 2 * out_channels)
    p["c1_shift_k"] = c1_shift[:, None]                               # (Cout, 1)
    return p


# ----------------------------------------------------------------------------
# UpConv.forward (i == depth - 2 path)
# ----------------------------------------------------------------------------
def upconv_forward(params, p, from_down, from_up, plane_type, c_last, i):
    depth = 4
    if i != 2:
        # TODO(synk): attention/scatter branch (generate_plane_features /
        # sample_plane_feature) not implemented; see header comment.
        raise NotImplementedError("only the i == depth-2 (i == 2) path is implemented")
    planes = ("xy", "xz", "yz")
    B, Cin, H, W = from_up["xy"].shape
    Cd = from_down["xy"].shape[1]
    Cout = params["up_w_k"].shape[0]

    # Stack (plane, batch) into one leading axis.  NCHW -> (N, C, H*W) is a
    # plain reshape (channels stay on sublanes, pixels go to lanes), so no
    # transposes are needed on either side of the kernel.
    up_stack = jnp.stack([from_up[k] for k in planes], 0).reshape(3 * B, Cin, H * W)
    dn_stack = jnp.stack([from_down[k] for k in planes], 0).reshape(3 * B, Cd, H * W)

    out = fused_upconv(up_stack, dn_stack, _tap_masks(H, W),
                       params["up_w_k"], params["up_shift_k"],
                       params["c1_w_k"], params["c1_shift_k"], H, W)
    out = out.reshape(3, B, Cout, H, W)

    # NOTE: conv1 for planes not in plane_type is computed and dropped (the
    # reference module also runs the up/concat stage for every plane).
    x = {name: out[j] for j, name in enumerate(planes) if name in plane_type}
    assert i == depth - 2
    return x, c_last


# ----------------------------------------------------------------------------
# Pure-JAX reference (NCHW, lax.conv) for verification
# ----------------------------------------------------------------------------
def _bn_eval_nchw(y, gamma, beta, mean, var, eps=1e-5):
    inv = gamma / jnp.sqrt(var + eps)
    return (y - mean[None, :, None, None]) * inv[None, :, None, None] \
        + beta[None, :, None, None]


def reference_forward(params, from_down, from_up):
    dn = ("NCHW", "OIHW", "NCHW")
    out = {}
    for plane in ("xy", "xz", "yz"):
        up = jax.lax.conv_general_dilated(from_up[plane], params["up_w_oihw"],
                                          (1, 1), ((0, 0), (0, 0)),
                                          dimension_numbers=dn)
        up = up + params["up_b"][None, :, None, None]
        up = _bn_eval_nchw(up, params["up_bn_gamma"], params["up_bn_beta"],
                           params["up_bn_mean"], params["up_bn_var"])
        cat = jnp.concatenate([up, from_down[plane]], axis=1)
        y = jax.lax.conv_general_dilated(cat, params["c1_w_oihw"],
                                         (1, 1), ((1, 1), (1, 1)),
                                         dimension_numbers=dn)
        y = y + params["c1_b"][None, :, None, None]
        y = _bn_eval_nchw(y, params["c1_bn_gamma"], params["c1_bn_beta"],
                          params["c1_bn_mean"], params["c1_bn_var"])
        out[plane] = jnp.maximum(y, 0.0)
    return out


# ----------------------------------------------------------------------------
if __name__ == "__main__":
    key = jax.random.PRNGKey(0)
    k_par, k_up, k_dn, k_p, k_c = jax.random.split(key, 5)

    B = 2
    in_channels = 4
    out_channels = 4
    H = W = 16
    n_pts = 8

    params = init_params(k_par, in_channels, out_channels)

    up_keys = jax.random.split(k_up, 3)
    dn_keys = jax.random.split(k_dn, 3)
    planes = ("xy", "xz", "yz")
    from_up = {name: jax.random.normal(up_keys[j], (B, in_channels, H, W), jnp.float32)
               for j, name in enumerate(planes)}
    from_down = {name: jax.random.normal(dn_keys[j], (B, out_channels, H, W), jnp.float32)
                 for j, name in enumerate(planes)}
    p = jax.random.uniform(k_p, (B, n_pts, 3), jnp.float32)
    c_last = jax.random.normal(k_c, (B, n_pts, in_channels), jnp.float32)

    x_out, c_out = upconv_forward(params, p, from_down, from_up,
                                  plane_type=("xy", "xz", "yz"),
                                  c_last=c_last, i=2)
    jax.block_until_ready(x_out)
    jax.block_until_ready(c_out)

    ref = reference_forward(params, from_down, from_up)
    for plane in planes:
        np.testing.assert_allclose(np.asarray(x_out[plane]), np.asarray(ref[plane]),
                                   rtol=1e-3, atol=1e-3)
    np.testing.assert_allclose(np.asarray(c_out), np.asarray(c_last), rtol=0, atol=0)

    print("KERNEL_OK")
</pallas_src>

<mosaic_0001>
module attributes {stable_mosaic.version = 11 : i64} {
  func.func @_fused_upconv_kernel(%arg0: i32, %arg1: memref<1x4x256xf32, #tpu.memory_space<vmem>>, %arg2: memref<1x4x256xf32, #tpu.memory_space<vmem>>, %arg3: memref<9x256xf32, #tpu.memory_space<vmem>>, %arg4: memref<4x4xf32, #tpu.memory_space<vmem>>, %arg5: memref<4x1xf32, #tpu.memory_space<vmem>>, %arg6: memref<4x72xf32, #tpu.memory_space<vmem>>, %arg7: memref<4x1xf32, #tpu.memory_space<vmem>>, %arg8: memref<1x4x256xf32, #tpu.memory_space<vmem>>) attributes {dimension_semantics = [#tpu.dimension_semantics<parallel>], iteration_bounds = array<i64: 6>, scalar_prefetch = 0 : i64, scratch_operands = 0 : i64, tpu.core_type = #tpu.core_type<tc>, window_params = [{transform_indices = @transform_0, window_bounds = array<i64: 1, 4, 256>}, {transform_indices = @transform_1, window_bounds = array<i64: 1, 4, 256>}, {pipeline_mode = #tpu.pipeline_mode<synchronous>, transform_indices = @transform_2, window_bounds = array<i64: 9, 256>}, {pipeline_mode = #tpu.pipeline_mode<synchronous>, transform_indices = @transform_3, window_bounds = array<i64: 4, 4>}, {pipeline_mode = #tpu.pipeline_mode<synchronous>, transform_indices = @transform_4, window_bounds = array<i64: 4, 1>}, {pipeline_mode = #tpu.pipeline_mode<synchronous>, transform_indices = @transform_5, window_bounds = array<i64: 4, 72>}, {pipeline_mode = #tpu.pipeline_mode<synchronous>, transform_indices = @transform_6, window_bounds = array<i64: 4, 1>}, {transform_indices = @transform_7, window_bounds = array<i64: 1, 4, 256>}]} {
    %c0 = arith.constant 0 : index
    %c0_0 = arith.constant 0 : index
    %0 = vector.load %arg4[%c0, %c0_0] : memref<4x4xf32, #tpu.memory_space<vmem>>, vector<4x4xf32>
    %c0_1 = arith.constant 0 : index
    %c0_2 = arith.constant 0 : index
    %c0_3 = arith.constant 0 : index
    %1 = vector.load %arg1[%c0_1, %c0_2, %c0_3] : memref<1x4x256xf32, #tpu.memory_space<vmem>>, vector<1x4x256xf32>
    %2 = vector.shape_cast %1 : vector<1x4x256xf32> to vector<4x256xf32>
    %cst = arith.constant dense<0.000000e+00> : vector<4x256xf32>
    %3 = tpu.matmul %0, %2, %cst {dimension_numbers = #tpu.dot_dimension_numbers<[1], [0], [0], [1], [0, 0, 1, 1], [], []>} : vector<4x4xf32>, vector<4x256xf32>, vector<4x256xf32> -> vector<4x256xf32>
    %c0_4 = arith.constant 0 : index
    %c0_5 = arith.constant 0 : index
    %4 = vector.load %arg5[%c0_4, %c0_5] : memref<4x1xf32, #tpu.memory_space<vmem>>, vector<4x1xf32>
    %5 = vector.broadcast %4 : vector<4x1xf32> to vector<4x256xf32>
    %6 = arith.addf %3, %5 : vector<4x256xf32>
    %c0_6 = arith.constant 0 : index
    %c0_7 = arith.constant 0 : index
    %c0_8 = arith.constant 0 : index
    %7 = vector.load %arg2[%c0_6, %c0_7, %c0_8] : memref<1x4x256xf32, #tpu.memory_space<vmem>>, vector<1x4x256xf32>
    %8 = vector.shape_cast %7 : vector<1x4x256xf32> to vector<4x256xf32>
    %9 = tpu.concatenate %6, %8 in 0 : vector<4x256xf32>, vector<4x256xf32> -> vector<8x256xf32>
    %c17_i32 = arith.constant 17 : i32
    %10 = tpu.dynamic_rotate %9 by %c17_i32 dim 1 : vector<8x256xf32>, i32 -> vector<8x256xf32>
    %c0_9 = arith.constant 0 : index
    %c0_10 = arith.constant 0 : index
    %11 = vector.load %arg3[%c0_9, %c0_10] : memref<9x256xf32, #tpu.memory_space<vmem>>, vector<1x256xf32>
    %12 = vector.broadcast %11 : vector<1x256xf32> to vector<8x256xf32>
    %13 = arith.mulf %10, %12 : vector<8x256xf32>
    %c16_i32 = arith.constant 16 : i32
    %14 = tpu.dynamic_rotate %9 by %c16_i32 dim 1 : vector<8x256xf32>, i32 -> vector<8x256xf32>
    %c1 = arith.constant 1 : index
    %c0_11 = arith.constant 0 : index
    %15 = vector.load %arg3[%c1, %c0_11] : memref<9x256xf32, #tpu.memory_space<vmem>>, vector<1x256xf32>
    %16 = vector.broadcast %15 : vector<1x256xf32> to vector<8x256xf32>
    %17 = arith.mulf %14, %16 : vector<8x256xf32>
    %c15_i32 = arith.constant 15 : i32
    %18 = tpu.dynamic_rotate %9 by %c15_i32 dim 1 : vector<8x256xf32>, i32 -> vector<8x256xf32>
    %c2 = arith.constant 2 : index
    %c0_12 = arith.constant 0 : index
    %19 = vector.load %arg3[%c2, %c0_12] : memref<9x256xf32, #tpu.memory_space<vmem>>, vector<1x256xf32>
    %20 = vector.broadcast %19 : vector<1x256xf32> to vector<8x256xf32>
    %21 = arith.mulf %18, %20 : vector<8x256xf32>
    %c1_i32 = arith.constant 1 : i32
    %22 = tpu.dynamic_rotate %9 by %c1_i32 dim 1 : vector<8x256xf32>, i32 -> vector<8x256xf32>
    %c3 = arith.constant 3 : index
    %c0_13 = arith.constant 0 : index
    %23 = vector.load %arg3[%c3, %c0_13] : memref<9x256xf32, #tpu.memory_space<vmem>>, vector<1x256xf32>
    %24 = vector.broadcast %23 : vector<1x256xf32> to vector<8x256xf32>
    %25 = arith.mulf %22, %24 : vector<8x256xf32>
    %c4 = arith.constant 4 : index
    %c0_14 = arith.constant 0 : index
    %26 = vector.load %arg3[%c4, %c0_14] : memref<9x256xf32, #tpu.memory_space<vmem>>, vector<1x256xf32>
    %27 = vector.broadcast %26 : vector<1x256xf32> to vector<8x256xf32>
    %28 = arith.mulf %9, %27 : vector<8x256xf32>
    %c255_i32 = arith.constant 255 : i32
    %29 = tpu.dynamic_rotate %9 by %c255_i32 dim 1 : vector<8x256xf32>, i32 -> vector<8x256xf32>
    %c5 = arith.constant 5 : index
    %c0_15 = arith.constant 0 : index
    %30 = vector.load %arg3[%c5, %c0_15] : memref<9x256xf32, #tpu.memory_space<vmem>>, vector<1x256xf32>
    %31 = vector.broadcast %30 : vector<1x256xf32> to vector<8x256xf32>
    %32 = arith.mulf %29, %31 : vector<8x256xf32>
    %c241_i32 = arith.constant 241 : i32
    %33 = tpu.dynamic_rotate %9 by %c241_i32 dim 1 : vector<8x256xf32>, i32 -> vector<8x256xf32>
    %c6 = arith.constant 6 : index
    %c0_16 = arith.constant 0 : index
    %34 = vector.load %arg3[%c6, %c0_16] : memref<9x256xf32, #tpu.memory_space<vmem>>, vector<1x256xf32>
    %35 = vector.broadcast %34 : vector<1x256xf32> to vector<8x256xf32>
    %36 = arith.mulf %33, %35 : vector<8x256xf32>
    %c240_i32 = arith.constant 240 : i32
    %37 = tpu.dynamic_rotate %9 by %c240_i32 dim 1 : vector<8x256xf32>, i32 -> vector<8x256xf32>
    %c7 = arith.constant 7 : index
    %c0_17 = arith.constant 0 : index
    %38 = vector.load %arg3[%c7, %c0_17] : memref<9x256xf32, #tpu.memory_space<vmem>>, vector<1x256xf32>
    %39 = vector.broadcast %38 : vector<1x256xf32> to vector<8x256xf32>
    %40 = arith.mulf %37, %39 : vector<8x256xf32>
    %c239_i32 = arith.constant 239 : i32
    %41 = tpu.dynamic_rotate %9 by %c239_i32 dim 1 : vector<8x256xf32>, i32 -> vector<8x256xf32>
    %c8 = arith.constant 8 : index
    %c0_18 = arith.constant 0 : index
    %42 = vector.load %arg3[%c8, %c0_18] : memref<9x256xf32, #tpu.memory_space<vmem>>, vector<1x256xf32>
    %43 = vector.broadcast %42 : vector<1x256xf32> to vector<8x256xf32>
    %44 = arith.mulf %41, %43 : vector<8x256xf32>
    %45 = tpu.concatenate %13, %17, %21, %25, %28, %32, %36, %40, %44 in 0 : vector<8x256xf32>, vector<8x256xf32>, vector<8x256xf32>, vector<8x256xf32>, vector<8x256xf32>, vector<8x256xf32>, vector<8x256xf32>, vector<8x256xf32>, vector<8x256xf32> -> vector<72x256xf32>
    %c0_19 = arith.constant 0 : index
    %c0_20 = arith.constant 0 : index
    %46 = vector.load %arg6[%c0_19, %c0_20] : memref<4x72xf32, #tpu.memory_space<vmem>>, vector<4x72xf32>
    %cst_21 = arith.constant dense<0.000000e+00> : vector<4x256xf32>
    %47 = tpu.matmul %46, %45, %cst_21 {dimension_numbers = #tpu.dot_dimension_numbers<[1], [0], [0], [1], [0, 0, 1, 1], [], []>} : vector<4x72xf32>, vector<72x256xf32>, vector<4x256xf32> -> vector<4x256xf32>
    %c0_22 = arith.constant 0 : index
    %c0_23 = arith.constant 0 : index
    %48 = vector.load %arg7[%c0_22, %c0_23] : memref<4x1xf32, #tpu.memory_space<vmem>>, vector<4x1xf32>
    %49 = vector.broadcast %48 : vector<4x1xf32> to vector<4x256xf32>
    %50 = arith.addf %47, %49 : vector<4x256xf32>
    %cst_24 = arith.constant 0.000000e+00 : f32
    %51 = vector.broadcast %cst_24 : f32 to vector<4x256xf32>
    %52 = arith.maximumf %50, %51 : vector<4x256xf32>
    %c0_25 = arith.constant 0 : index
    %c0_26 = arith.constant 0 : index
    %c0_27 = arith.constant 0 : index
    %53 = vector.load %arg8[%c0_25, %c0_26, %c0_27] : memref<1x4x256xf32, #tpu.memory_space<vmem>>, vector<1x4x256xf32>
    %54 = vector.shape_cast %53 : vector<1x4x256xf32> to vector<4x256xf32>
    %55 = vector.shape_cast %52 : vector<4x256xf32> to vector<1x4x256xf32>
    tpu.vector_store %arg8[%c0_25, %c0_26, %c0_27], %55 {strides = array<i32>} : memref<1x4x256xf32, #tpu.memory_space<vmem>>, vector<1x4x256xf32>,
    return
  }
  func.func @transform_0(%arg0: i32) -> (i32, i32, i32) {
    %c0_i32 = arith.constant 0 : i32
    %c0_i32_0 = arith.constant 0 : i32
    %c0_i32_1 = arith.constant 0 : i32
    return %arg0, %c0_i32, %c0_i32_0 : i32, i32, i32
  }
  func.func @transform_1(%arg0: i32) -> (i32, i32, i32) {
    %c0_i32 = arith.constant 0 : i32
    %c0_i32_0 = arith.constant 0 : i32
    %c0_i32_1 = arith.constant 0 : i32
    return %arg0, %c0_i32, %c0_i32_0 : i32, i32, i32
  }
  func.func @transform_2(%arg0: i32) -> (i32, i32) {
    %c0_i32 = arith.constant 0 : i32
    %c0_i32_0 = arith.constant 0 : i32
    %c0_i32_1 = arith.constant 0 : i32
    return %c0_i32, %c0_i32_0 : i32, i32
  }
  func.func @transform_3(%arg0: i32) -> (i32, i32) {
    %c0_i32 = arith.constant 0 : i32
    %c0_i32_0 = arith.constant 0 : i32
    %c0_i32_1 = arith.constant 0 : i32
    return %c0_i32, %c0_i32_0 : i32, i32
  }
  func.func @transform_4(%arg0: i32) -> (i32, i32) {
    %c0_i32 = arith.constant 0 : i32
    %c0_i32_0 = arith.constant 0 : i32
    %c0_i32_1 = arith.constant 0 : i32
    return %c0_i32, %c0_i32_0 : i32, i32
  }
  func.func @transform_5(%arg0: i32) -> (i32, i32) {
    %c0_i32 = arith.constant 0 : i32
    %c0_i32_0 = arith.constant 0 : i32
    %c0_i32_1 = arith.constant 0 : i32
    return %c0_i32, %c0_i32_0 : i32, i32
  }
  func.func @transform_6(%arg0: i32) -> (i32, i32) {
    %c0_i32 = arith.constant 0 : i32
    %c0_i32_0 = arith.constant 0 : i32
    %c0_i32_1 = arith.constant 0 : i32
    return %c0_i32, %c0_i32_0 : i32, i32
  }
  func.func @transform_7(%arg0: i32) -> (i32, i32, i32) {
    %c0_i32 = arith.constant 0 : i32
    %c0_i32_0 = arith.constant 0 : i32
    %c0_i32_1 = arith.constant 0 : i32
    return %arg0, %c0_i32, %c0_i32_0 : i32, i32, i32
  }
}

</mosaic_0001>

<llo_original>
// kernel: tpu_custom_call.1
$region0: #{tpu_custom_call.1}
  #allocation0 [shape = 'u32[]', space=smem, size = 0x4, offset = 0x4, fixed_abs, tag = 'smem constant byte address 0x4 - core index']
  #allocation1 [shape = 'u32[144,128]{1,0:T(1,128)}', space=vmem, size = 0x12000, scoped, tag = 'internal scratch']
  %s0 = inlined_call_operand.hbm [shape: f32[6,4,256], index: 0, kind: input, shape index: {}]
  %s1 = inlined_call_operand.hbm [shape: f32[6,4,256], index: 1, kind: input, shape index: {}]
  %s2 = inlined_call_operand.hbm [shape: f32[9,256], index: 2, kind: input, shape index: {}]
  %s3 = inlined_call_operand.vmem [shape: f32[4,4], index: 3, kind: input, shape index: {}]
  %s4 = inlined_call_operand.vmem [shape: f32[4,1], index: 4, kind: input, shape index: {}]
  %s5 = inlined_call_operand.vmem [shape: f32[4,72], index: 5, kind: input, shape index: {}]
  %s6 = inlined_call_operand.vmem [shape: f32[4,1], index: 6, kind: input, shape index: {}]
  %s7 = inlined_call_operand.hbm [shape: f32[6,4,256], index: 7, kind: output, shape index: {}]
  %s8 = sld [smem:[#allocation0]]
  $region73: #{tpu_custom_call.1} parent=0
    _
  %s10 = ssub.s32 1, %s8
  %s11 = scalar_select 0, %s10, %s8
  $region1: #{tpu_custom_call.1} parent=0
    #allocation2 [shape = 'u8[8192]{0}', space=vmem, size = 0x2000, scoped, tag = 'input window, operand 0']
    #allocation3 [shape = 's32[2]{0}', space=sflag, size = 0x8, scoped, tag = 'scoped memory for tpu_custom_call.1']
    #allocation4 [shape = 's32[2]{0}', space=sflag, size = 0x8, scoped, tag = 'scoped memory for tpu_custom_call.1']
    #allocation5 [shape = 'u8[8192]{0}', space=vmem, size = 0x2000, scoped, tag = 'input window, operand 1']
    #allocation6 [shape = 's32[2]{0}', space=sflag, size = 0x8, scoped, tag = 'scoped memory for tpu_custom_call.1']
    #allocation7 [shape = 'u8[16384]{0}', space=vmem, size = 0x4000, scoped, tag = 'input window, operand 2, single buffered']
    #allocation8 [shape = 'u8[8192]{0}', space=vmem, size = 0x2000, scoped, tag = 'output window, operand 0']
    %12 = vsyncpa [#allocation3], 0
    %s13 = scalar_lea.sflag [#allocation3], 1
    %14 = vsyncpa %s13, 0
    %15 = vsyncpa [#allocation6], 0
    %s16 = scalar_lea.sflag [#allocation6], 1
    %17 = vsyncpa %s16, 0
    %18 = vsyncpa [#allocation4], 0
    %s19 = scalar_lea.sflag [#allocation4], 1
    %20 = vsyncpa %s19, 0
    loop: start=0, step=1, limit=8
    $region2: #{tpu_custom_call.1} parent=1 // loop_pre_header
      _
    $region3: #{tpu_custom_call.1} parent=1 // loop_header
      %s22 = sphi 0, %s26
      %p23 = scmp.ge.s32.totalorder %s22, 8
      %s32 = sphi 0, %s34
      %s35 = sphi 0, %s32
      %s36 = sphi 0, %s35
      %s52 = sphi 0, %s36
      %s58 = sphi 0, %s60
      %s61 = sphi 0, %s58
      %s62 = sphi 0, %s61
      %s78 = sphi 0, %s62
      %s82 = sphi 0, %s82
      %s84 = sphi 0, %s82
      %s85 = sphi 0, %s84
      %s99 = sphi 0, %s85
      %s103 = sphi 0, %s103
      %s105 = sphi 0, %s103
      %s106 = sphi 0, %s105
      %s120 = sphi 0, %s106
      %s124 = sphi 0, %s124
      %s126 = sphi 0, %s124
      %s127 = sphi 0, %s126
      %s141 = sphi 0, %s127
      %s145 = sphi 0, %s145
      %s147 = sphi 0, %s145
      %s148 = sphi 0, %s147
      %s162 = sphi 0, %s148
      %s166 = sphi 0, %s166
      %s168 = sphi 0, %s166
      %s169 = sphi 0, %s168
      %s183 = sphi 0, %s169
      %s189 = sphi 0, %s191
      %s192 = sphi 0, %s189
      %s193 = sphi 0, %s192
      %s209 = sphi 0, %s193
    $region4: #{tpu_custom_call.1} parent=1 // loop_header_branch
      %25 = sbr.rel (%p23) target = $region8
    $region5: #{tpu_custom_call.1} parent=1 // loop_body
      %s27 = ssub.s32 %s22, 1
      %s28 = ssub.s32 %s22, 2
      %s29 = sadd.s32 %s22, 1
      %s30 = ssub.s32 %s22, %s29
      %p31 = scmp.eq.s32.totalorder %s30, 0
      %s33 = sadd.s32 %s32, 1
      %s34 = scalar_select %p31, %s32, %s33
      %p37 = pneg %p31
      %p38 = scmp.eq.s32.totalorder %s22, 5
      %p39 = por %p37, %p38
      %p40 = scmp.ne.s32.totalorder %s32, %s35
      %p41 = scmp.eq.s32.totalorder %s22, 0
      %p42 = por %p40, %p41
      %p43 = scmp.ne.s32.totalorder %s32, %s35
      %p44 = scmp.eq.s32.totalorder %s27, 5
      %p45 = por %p43, %p44
      %p46 = scmp.ne.s32.totalorder %s35, %s36
      %p47 = scmp.eq.s32.totalorder %s27, 0
      %p48 = por %p46, %p47
      %p49 = scmp.ne.s32.totalorder %s35, %s36
      %p50 = scmp.eq.s32.totalorder %s28, 5
      %p51 = por %p49, %p50
      %p53 = scmp.ne.s32.totalorder %s36, %s52
      %p54 = scmp.eq.s32.totalorder %s28, 0
      %p55 = por %p53, %p54
      %s56 = ssub.s32 %s22, %s29
      %p57 = scmp.eq.s32.totalorder %s56, 0
      %s59 = sadd.s32 %s58, 1
      %s60 = scalar_select %p57, %s58, %s59
      %p63 = pneg %p57
      %p64 = scmp.eq.s32.totalorder %s22, 5
      %p65 = por %p63, %p64
      %p66 = scmp.ne.s32.totalorder %s58, %s61
      %p67 = scmp.eq.s32.totalorder %s22, 0
      %p68 = por %p66, %p67
      %p69 = scmp.ne.s32.totalorder %s58, %s61
      %p70 = scmp.eq.s32.totalorder %s27, 5
      %p71 = por %p69, %p70
      %p72 = scmp.ne.s32.totalorder %s61, %s62
      %p73 = scmp.eq.s32.totalorder %s27, 0
      %p74 = por %p72, %p73
      %p75 = scmp.ne.s32.totalorder %s61, %s62
      %p76 = scmp.eq.s32.totalorder %s28, 5
      %p77 = por %p75, %p76
      %p79 = scmp.ne.s32.totalorder %s62, %s78
      %p80 = scmp.eq.s32.totalorder %s28, 0
      %p81 = por %p79, %p80
      %s83 = sadd.s32 %s82, 1
      %p86 = scmp.eq.s32.totalorder %s22, 5
      %p87 = scmp.ne.s32.totalorder %s82, %s84
      %p88 = scmp.eq.s32.totalorder %s22, 0
      %p89 = por %p87, %p88
      %p90 = scmp.ne.s32.totalorder %s82, %s84
      %p91 = scmp.eq.s32.totalorder %s27, 5
      %p92 = por %p90, %p91
      %p93 = scmp.ne.s32.totalorder %s84, %s85
      %p94 = scmp.eq.s32.totalorder %s27, 0
      %p95 = por %p93, %p94
      %p96 = scmp.ne.s32.totalorder %s84, %s85
      %p97 = scmp.eq.s32.totalorder %s28, 5
      %p98 = por %p96, %p97
      %p100 = scmp.ne.s32.totalorder %s85, %s99
      %p101 = scmp.eq.s32.totalorder %s28, 0
      %p102 = por %p100, %p101
      %s104 = sadd.s32 %s103, 1
      %p107 = scmp.eq.s32.totalorder %s22, 5
      %p108 = scmp.ne.s32.totalorder %s103, %s105
      %p109 = scmp.eq.s32.totalorder %s22, 0
      %p110 = por %p108, %p109
      %p111 = scmp.ne.s32.totalorder %s103, %s105
      %p112 = scmp.eq.s32.totalorder %s27, 5
      %p113 = por %p111, %p112
      %p114 = scmp.ne.s32.totalorder %s105, %s106
      %p115 = scmp.eq.s32.totalorder %s27, 0
      %p116 = por %p114, %p115
      %p117 = scmp.ne.s32.totalorder %s105, %s106
      %p118 = scmp.eq.s32.totalorder %s28, 5
      %p119 = por %p117, %p118
      %p121 = scmp.ne.s32.totalorder %s106, %s120
      %p122 = scmp.eq.s32.totalorder %s28, 0
      %p123 = por %p121, %p122
      %s125 = sadd.s32 %s124, 1
      %p128 = scmp.eq.s32.totalorder %s22, 5
      %p129 = scmp.ne.s32.totalorder %s124, %s126
      %p130 = scmp.eq.s32.totalorder %s22, 0
      %p131 = por %p129, %p130
      %p132 = scmp.ne.s32.totalorder %s124, %s126
      %p133 = scmp.eq.s32.totalorder %s27, 5
      %p134 = por %p132, %p133
      %p135 = scmp.ne.s32.totalorder %s126, %s127
      %p136 = scmp.eq.s32.totalorder %s27, 0
      %p137 = por %p135, %p136
      %p138 = scmp.ne.s32.totalorder %s126, %s127
      %p139 = scmp.eq.s32.totalorder %s28, 5
      %p140 = por %p138, %p139
      %p142 = scmp.ne.s32.totalorder %s127, %s141
      %p143 = scmp.eq.s32.totalorder %s28, 0
      %p144 = por %p142, %p143
      %s146 = sadd.s32 %s145, 1
      %p149 = scmp.eq.s32.totalorder %s22, 5
      %p150 = scmp.ne.s32.totalorder %s145, %s147
      %p151 = scmp.eq.s32.totalorder %s22, 0
      %p152 = por %p150, %p151
      %p153 = scmp.ne.s32.totalorder %s145, %s147
      %p154 = scmp.eq.s32.totalorder %s27, 5
      %p155 = por %p153, %p154
      %p156 = scmp.ne.s32.totalorder %s147, %s148
      %p157 = scmp.eq.s32.totalorder %s27, 0
      %p158 = por %p156, %p157
      %p159 = scmp.ne.s32.totalorder %s147, %s148
      %p160 = scmp.eq.s32.totalorder %s28, 5
      %p161 = por %p159, %p160
      %p163 = scmp.ne.s32.totalorder %s148, %s162
      %p164 = scmp.eq.s32.totalorder %s28, 0
      %p165 = por %p163, %p164
      %s167 = sadd.s32 %s166, 1
      %p170 = scmp.eq.s32.totalorder %s22, 5
      %p171 = scmp.ne.s32.totalorder %s166, %s168
      %p172 = scmp.eq.s32.totalorder %s22, 0
      %p173 = por %p171, %p172
      %p174 = scmp.ne.s32.totalorder %s166, %s168
      %p175 = scmp.eq.s32.totalorder %s27, 5
      %p176 = por %p174, %p175
      %p177 = scmp.ne.s32.totalorder %s168, %s169
      %p178 = scmp.eq.s32.totalorder %s27, 0
      %p179 = por %p177, %p178
      %p180 = scmp.ne.s32.totalorder %s168, %s169
      %p181 = scmp.eq.s32.totalorder %s28, 5
      %p182 = por %p180, %p181
      %p184 = scmp.ne.s32.totalorder %s169, %s183
      %p185 = scmp.eq.s32.totalorder %s28, 0
      %p186 = por %p184, %p185
      %s187 = ssub.s32 %s22, %s29
      %p188 = scmp.eq.s32.totalorder %s187, 0
      %s190 = sadd.s32 %s189, 1
      %s191 = scalar_select %p188, %s189, %s190
      %p194 = pneg %p188
      %p195 = scmp.eq.s32.totalorder %s22, 5
      %p196 = por %p194, %p195
      %p197 = scmp.ne.s32.totalorder %s189, %s192
      %p198 = scmp.eq.s32.totalorder %s22, 0
      %p199 = por %p197, %p198
      %p200 = scmp.ne.s32.totalorder %s189, %s192
      %p201 = scmp.eq.s32.totalorder %s27, 5
      %p202 = por %p200, %p201
      %p203 = scmp.ne.s32.totalorder %s192, %s193
      %p204 = scmp.eq.s32.totalorder %s27, 0
      %p205 = por %p203, %p204
      %p206 = scmp.ne.s32.totalorder %s192, %s193
      %p207 = scmp.eq.s32.totalorder %s28, 5
      %p208 = por %p206, %p207
      %p210 = scmp.ne.s32.totalorder %s193, %s209
      %p211 = scmp.eq.s32.totalorder %s28, 0
      %p212 = por %p210, %p211
      %p213 = scmp.le.s32.totalorder 1, %s22
      %p214 = scmp.lt.s32.totalorder %s22, 7
      %p215 = pnand %p213, %p214
      %p216 = pneg %p215
      // Predicated region
      $region9: #{tpu_custom_call.1} parent=5 // pred_check
        _
      $region10: #{tpu_custom_call.1} parent=5 // pred_check_branch
        %218 = sbr.rel (%p215) target = $region12
      $region11: #{tpu_custom_call.1} parent=5 // pred_region
        %s219 = ssub.s32 %s22, 1
        // Predicated region
        $region13: #{tpu_custom_call.1} parent=11 // pred_check
          %p220 = pneg %p95
        $region14: #{tpu_custom_call.1} parent=11 // pred_check_branch
          %222 = sbr.rel (%p220) target = $region16
        $region15: #{tpu_custom_call.1} parent=11 // pred_region
          %s224 = ssub.s32 512, 512
          %225 = vsyncadd [#allocation6], %s224
          %s226 = sshll.u32 [#allocation7], 4
          %s227 = int_to_ptr.vmem [resolvable:$true] %s226
          %232 = dma.hbm_to_vmem [thread:$0]  %s2, 512, %s227, [#allocation6], 256, 256, 16
        $region16: #{tpu_custom_call.1} parent=11 // pred_fallthru
          _
        // Predicated region
        $region17: #{tpu_custom_call.1} parent=11 // pred_check
          %p233 = pneg %p116
        $region18: #{tpu_custom_call.1} parent=11 // pred_check_branch
          %235 = sbr.rel (%p233) target = $region20
        $region19: #{tpu_custom_call.1} parent=11 // pred_region
          _
        $region20: #{tpu_custom_call.1} parent=11 // pred_fallthru
          _
        // Predicated region
        $region21: #{tpu_custom_call.1} parent=11 // pred_check
          %p236 = pneg %p137
        $region22: #{tpu_custom_call.1} parent=11 // pred_check_branch
          %238 = sbr.rel (%p236) target = $region24
        $region23: #{tpu_custom_call.1} parent=11 // pred_region
          _
        $region24: #{tpu_custom_call.1} parent=11 // pred_fallthru
          _
        // Predicated region
        $region25: #{tpu_custom_call.1} parent=11 // pred_check
          %p239 = pneg %p158
        $region26: #{tpu_custom_call.1} parent=11 // pred_check_branch
          %241 = sbr.rel (%p239) target = $region28
        $region27: #{tpu_custom_call.1} parent=11 // pred_region
          _
        $region28: #{tpu_custom_call.1} parent=11 // pred_fallthru
          _
        // Predicated region
        $region29: #{tpu_custom_call.1} parent=11 // pred_check
          %p242 = pneg %p179
        $region30: #{tpu_custom_call.1} parent=11 // pred_check_branch
          %244 = sbr.rel (%p242) target = $region32
        $region31: #{tpu_custom_call.1} parent=11 // pred_region
          _
        $region32: #{tpu_custom_call.1} parent=11 // pred_fallthru
          _
      $region12: #{tpu_custom_call.1} parent=5 // pred_fallthru
        _
      %p245 = scmp.lt.s32.totalorder %s22, 6
      // Predicated region
      $region33: #{tpu_custom_call.1} parent=5 // pred_check
        %p246 = pneg %p245
      $region34: #{tpu_custom_call.1} parent=5 // pred_check_branch
        %248 = sbr.rel (%p246) target = $region36
      $region35: #{tpu_custom_call.1} parent=5 // pred_region
        // Predicated region
        $region37: #{tpu_custom_call.1} parent=35 // pred_check
          %p249 = pneg %p42
        $region38: #{tpu_custom_call.1} parent=35 // pred_check_branch
          %251 = sbr.rel (%p249) target = $region40
        $region39: #{tpu_custom_call.1} parent=35 // pred_region
          %s252 = sand.u32 %s32, 1
          %s253 = scalar_lea.sflag [#allocation3], %s252
          %s254 = sand.u32 %s32, 1
          %s255 = smul.addr %s254, 8
          %s256 = scalar_lea.vmem [#allocation2], %s255
          %s258 = ssub.s32 128, 128
          %259 = vsyncadd %s253, %s258
          %s260 = smul.addr %s22, 2
          %s261 = smul.addr %s260, 64
          %s262 = scalar_lea.hbm %s0, %s261
          %s264 = sshll.u32 %s256, 4
          %s265 = int_to_ptr.vmem [resolvable:$true] %s264
          %267 = dma.hbm_to_vmem [thread:$0]  %s262, 128, %s265, %s253
        $region40: #{tpu_custom_call.1} parent=35 // pred_fallthru
          _
        // Predicated region
        $region41: #{tpu_custom_call.1} parent=35 // pred_check
          %p268 = pneg %p68
        $region42: #{tpu_custom_call.1} parent=35 // pred_check_branch
          %270 = sbr.rel (%p268) target = $region44
        $region43: #{tpu_custom_call.1} parent=35 // pred_region
          %s271 = sand.u32 %s22, 1
          %s272 = scalar_lea.sflag [#allocation6], %s271
          %s273 = sand.u32 %s58, 1
          %s274 = smul.addr %s273, 8
          %s275 = scalar_lea.vmem [#allocation5], %s274
          %s277 = ssub.s32 128, 128
          %278 = vsyncadd %s272, %s277
          %s279 = smul.addr %s22, 2
          %s280 = smul.addr %s279, 64
          %s281 = scalar_lea.hbm %s1, %s280
          %s283 = sshll.u32 %s275, 4
          %s284 = int_to_ptr.vmem [resolvable:$true] %s283
          %286 = dma.hbm_to_vmem [thread:$0]  %s281, 128, %s284, %s272
        $region44: #{tpu_custom_call.1} parent=35 // pred_fallthru
          _
      $region36: #{tpu_custom_call.1} parent=5 // pred_fallthru
        _
      %p287 = scmp.le.s32.totalorder 1, %s22
      %p288 = scmp.lt.s32.totalorder %s22, 7
      %p289 = pnand %p287, %p288
      %p290 = pneg %p289
      // Predicated region
      $region45: #{tpu_custom_call.1} parent=5 // pred_check
        _
      $region46: #{tpu_custom_call.1} parent=5 // pred_check_branch
        %292 = sbr.rel (%p289) target = $region48
      $region47: #{tpu_custom_call.1} parent=5 // pred_region
        %s293 = ssub.s32 %s22, 1
        %s294 = sand.u32 %s35, 1
        %s295 = scalar_lea.sflag [#allocation3], %s294
        %s296 = sand.u32 %s35, 1
        %s297 = smul.addr %s296, 8
        %s298 = scalar_lea.vmem [#allocation2], %s297
        // Predicated region
        $region49: #{tpu_custom_call.1} parent=47 // pred_check
          %p299 = pneg %p48
        $region50: #{tpu_custom_call.1} parent=47 // pred_check_branch
          %301 = sbr.rel (%p299) target = $region52
        $region51: #{tpu_custom_call.1} parent=47 // pred_region
          %302 = dma.done %s295, 128
        $region52: #{tpu_custom_call.1} parent=47 // pred_fallthru
          _
        %s303 = sand.u32 %s27, 1
        %s304 = scalar_lea.sflag [#allocation6], %s303
        %s305 = sand.u32 %s61, 1
        %s306 = smul.addr %s305, 8
        %s307 = scalar_lea.vmem [#allocation5], %s306
        // Predicated region
        $region53: #{tpu_custom_call.1} parent=47 // pred_check
          %p308 = pneg %p74
        $region54: #{tpu_custom_call.1} parent=47 // pred_check_branch
          %310 = sbr.rel (%p308) target = $region56
        $region55: #{tpu_custom_call.1} parent=47 // pred_region
          %311 = dma.done %s304, 128
        $region56: #{tpu_custom_call.1} parent=47 // pred_fallthru
          _
        // Predicated region
        $region57: #{tpu_custom_call.1} parent=47 // pred_check
          %p312 = pneg %p95
        $region58: #{tpu_custom_call.1} parent=47 // pred_check_branch
          %314 = sbr.rel (%p312) target = $region60
        $region59: #{tpu_custom_call.1} parent=47 // pred_region
          %315 = dma.done [#allocation6], 512
        $region60: #{tpu_custom_call.1} parent=47 // pred_fallthru
          _
        %s316 = sand.u32 %s35, 1
        %s317 = scalar_lea.sflag [#allocation3], %s316
        %s318 = sand.u32 %s35, 1
        %s319 = smul.addr %s318, 8
        %s320 = scalar_lea.vmem [#allocation2], %s319
        %p321 = pneg %p48
        %p322 = pneg %p45
        %s323 = sand.u32 %s27, 1
        %s324 = scalar_lea.sflag [#allocation6], %s323
        %s325 = sand.u32 %s61, 1
        %s326 = smul.addr %s325, 8
        %s327 = scalar_lea.vmem [#allocation5], %s326
        %p328 = pneg %p74
        %p329 = pneg %p71
        %p330 = pneg %p95
        %p331 = pneg %p92
        %p332 = pneg %p116
        %p333 = pneg %p113
        %p334 = pneg %p137
        %p335 = pneg %p134
        %p336 = pneg %p158
        %p337 = pneg %p155
        %p338 = pneg %p179
        %p339 = pneg %p176
        %p340 = pneg %p205
        %p341 = pneg %p202
        %s342 = sand.u32 %s192, 1
        %s343 = scalar_lea.sflag [#allocation4], %s342
        %s344 = sand.u32 %s192, 1
        %s345 = smul.addr %s344, 8
        %s346 = scalar_lea.vmem [#allocation8], %s345
        %v347 = vld [vmem:[%s3] sm:$0xf]
        %v348 = vld [vmem:[%s298] sm:$0xff]
        %v349 = vld [vmem:[%s4] sm:$0xf]
        %351 = vset.pattern.permute.xlu0 0
        %352 = vperm.xlu0 %351, %v349
        %v353 = vpop.permute.xlu0 %352
        %v356 = vcombine.high %v348, %v348
        %vm357 = vcmask 31744
        %v359 = vsel %vm357, %v347, 0
        %vm361 = vcmask 1043456
        %v362 = vsel %vm361, %v348, 0
        %v364 = vsel %vm361, %v356, 0
        %366 = vmatprep.subr.mxu0 0.0
        %367 = vmatpush1.msra.mxu0 0.0
        %368 = vmatprep.subr.mxu0 0.0
        %369 = vmatpush1.msra.mxu0 0.0
        %370 = vmatprep.subr.mxu0 0.0
        %371 = vmatpush1.msra.mxu0 0.0
        %372 = vmatprep.subr.mxu0 0.0
        %373 = vmatpush1.msra.mxu0 0.0
        %374 = vmatprep.subr.mxu0 0.0
        %375 = vmatpush1.msra.mxu0 0.0
        %376 = vmatprep.subr.mxu0 0.0
        %377 = vmatpush1.msra.mxu0 0.0
        %378 = vmatprep.subr.mxu0 0.0
        %379 = vmatpush1.msra.mxu0 0.0
        %380 = vmatprep.subr.mxu0 0.0
        %381 = vmatpush1.msra.mxu0 0.0
        %382 = vmatprep.subr.mxu0 0.0
        %383 = vmatpush1.msra.mxu0 0.0
        %384 = vmatprep.subr.mxu0 0.0
        %385 = vmatpush1.msra.mxu0 0.0
        %386 = vmatprep.subr.mxu0 0.0
        %387 = vmatpush1.msra.mxu0 0.0
        %388 = vmatprep.subr.mxu0 0.0
        %389 = vmatpush1.msra.mxu0 0.0
        %390 = vmatprep.subr.mxu0 0.0
        %391 = vmatpush1.msra.mxu0 0.0
        %392 = vmatprep.subr.mxu0 0.0
        %393 = vmatpush1.msra.mxu0 0.0
        %394 = vmatprep.subr.mxu0 0.0
        %395 = vmatpush1.msra.mxu0 0.0
        %396 = vmatprep.subr.mxu0 %v364
        %397 = vmatpush1.msra.mxu0 %v362
        %398 = vmatprep.subr.mxu0 0.0
        %399 = vmatpush2.msra.mxu0 0.0
        %400 = vmatprep.subr.mxu0 0.0
        %401 = vmatpush2.msra.mxu0 0.0
        %402 = vmatprep.subr.mxu0 0.0
        %403 = vmatpush2.msra.mxu0 0.0
        %404 = vmatprep.subr.mxu0 0.0
        %405 = vmatpush2.msra.mxu0 0.0
        %406 = vmatprep.subr.mxu0 0.0
        %407 = vmatpush2.msra.mxu0 0.0
        %408 = vmatprep.subr.mxu0 0.0
        %409 = vmatpush2.msra.mxu0 0.0
        %410 = vmatprep.subr.mxu0 0.0
        %411 = vmatpush2.msra.mxu0 0.0
        %412 = vmatprep.subr.mxu0 0.0
        %413 = vmatpush2.msra.mxu0 0.0
        %414 = vmatprep.subr.mxu0 0.0
        %415 = vmatpush2.msra.mxu0 0.0
        %416 = vmatprep.subr.mxu0 0.0
        %417 = vmatpush2.msra.mxu0 0.0
        %418 = vmatprep.subr.mxu0 0.0
        %419 = vmatpush2.msra.mxu0 0.0
        %420 = vmatprep.subr.mxu0 0.0
        %421 = vmatpush2.msra.mxu0 0.0
        %422 = vmatprep.subr.mxu0 0.0
        %423 = vmatpush2.msra.mxu0 0.0
        %424 = vmatprep.subr.mxu0 0.0
        %425 = vmatpush2.msra.mxu0 0.0
        %426 = vmatprep.subr.mxu0 0.0
        %427 = vmatpush2.msra.mxu0 0.0
        %428 = vmatprep.subr.mxu0 0.0
        %429 = vmatpush2.msra.mxu0 0.0
        %430 = vmatprep.mubr.f32.mxu0 0.0
        %431 = vmatmul.mubr.f32.gmra.mxu0 %v359
        %v432 = vpop.f32.mrf.mxu0
        %v433 = vadd.f32 %v353, %v432
        %v434 = vpop.f32.mrf.mxu0
        %v435 = vadd.f32 %v353, %v434
        %436 = vdwg.mxu0
        %v437 = vld [vmem:[%s307] sm:$0xff]
        %v439 = vcombine.low %v437, %v437
        %v441 = vsel %vm361, %v433, %v439
        %v442 = vsel %vm361, %v435, %v437
        %443 = vrot.lane.b32.xlu0 %v441, 17
        %v444 = vpop.permute.xlu0 %443
        %445 = vrot.lane.b32.xlu0 %v442, 17
        %v446 = vpop.permute.xlu0 %445
        %v447 = vlaneseq
        %v448 = vand.u32 %v447, 127
        %vm449 = vcmp.lt.s32.totalorder %v448, 17
        %v450 = vsel %vm449, %v444, %v446
        %v451 = vsel %vm449, %v446, %v444
        %v452 = vld [vmem:[#allocation7] ss:$8 sm:$0x3]
        %v454 = vlaneseq
        %v455 = vshrl.u32 %v454, 7
        %v456 = vsub.s32 0, %v455
        %v457 = vrot.slane %v452, %v456
        %v458 = vlaneseq
        %v459 = vshrl.u32 %v458, 7
        %v460 = vsub.s32 1, %v459
        %v461 = vrot.slane %v452, %v460
        %v464 = vmul.f32 %v451, %v457
        %v465 = vmul.f32 %v450, %v461
        %466 = vrot.lane.b32.xlu0 %v441, 16
        %v467 = vpop.permute.xlu0 %466
        %468 = vrot.lane.b32.xlu0 %v442, 16
        %v469 = vpop.permute.xlu0 %468
        %vm470 = vcmp.lt.s32.totalorder %v448, 16
        %v471 = vsel %vm470, %v467, %v469
        %v472 = vsel %vm470, %v469, %v467
        %s473 = scalar_lea.vmem [#allocation7], 1
        %v474 = vld [vmem:[%s473] ss:$8 sm:$0x3]
        %v476 = vlaneseq
        %v477 = vshrl.u32 %v476, 7
        %v478 = vsub.s32 0, %v477
        %v479 = vrot.slane %v474, %v478
        %v480 = vlaneseq
        %v481 = vshrl.u32 %v480, 7
        %v482 = vsub.s32 1, %v481
        %v483 = vrot.slane %v474, %v482
        %v486 = vmul.f32 %v472, %v479
        %v487 = vmul.f32 %v471, %v483
        %488 = vrot.lane.b32.xlu0 %v441, 15
        %v489 = vpop.permute.xlu0 %488
        %490 = vrot.lane.b32.xlu0 %v442, 15
        %v491 = vpop.permute.xlu0 %490
        %vm492 = vcmp.lt.s32.totalorder %v448, 15
        %v493 = vsel %vm492, %v489, %v491
        %v494 = vsel %vm492, %v491, %v489
        %s495 = scalar_lea.vmem [#allocation7], 2
        %v496 = vld [vmem:[%s495] ss:$8 sm:$0x3]
        %v498 = vlaneseq
        %v499 = vshrl.u32 %v498, 7
        %v500 = vsub.s32 0, %v499
        %v501 = vrot.slane %v496, %v500
        %v502 = vlaneseq
        %v503 = vshrl.u32 %v502, 7
        %v504 = vsub.s32 1, %v503
        %v505 = vrot.slane %v496, %v504
        %v508 = vmul.f32 %v494, %v501
        %v509 = vmul.f32 %v493, %v505
        %510 = vrot.lane.b32.xlu0 %v441, 1
        %v511 = vpop.permute.xlu0 %510
        %512 = vrot.lane.b32.xlu0 %v442, 1
        %v513 = vpop.permute.xlu0 %512
        %vm514 = vcmp.lt.s32.totalorder %v448, 1
        %v515 = vsel %vm514, %v511, %v513
        %v516 = vsel %vm514, %v513, %v511
        %s517 = scalar_lea.vmem [#allocation7], 3
        %v518 = vld [vmem:[%s517] ss:$8 sm:$0x3]
        %v520 = vlaneseq
        %v521 = vshrl.u32 %v520, 7
        %v522 = vsub.s32 0, %v521
        %v523 = vrot.slane %v518, %v522
        %v524 = vlaneseq
        %v525 = vshrl.u32 %v524, 7
        %v526 = vsub.s32 1, %v525
        %v527 = vrot.slane %v518, %v526
        %v530 = vmul.f32 %v516, %v523
        %v531 = vmul.f32 %v515, %v527
        %s532 = scalar_lea.vmem [#allocation7], 4
        %v533 = vld [vmem:[%s532] ss:$8 sm:$0x3]
        %v535 = vlaneseq
        %v536 = vshrl.u32 %v535, 7
        %v537 = vsub.s32 0, %v536
        %v538 = vrot.slane %v533, %v537
        %v539 = vlaneseq
        %v540 = vshrl.u32 %v539, 7
        %v541 = vsub.s32 1, %v540
        %v542 = vrot.slane %v533, %v541
        %v545 = vmul.f32 %v441, %v538
        %v546 = vmul.f32 %v442, %v542
        %547 = vrot.lane.b32.xlu0 %v441, 127
        %v548 = vpop.permute.xlu0 %547
        %549 = vrot.lane.b32.xlu0 %v442, 127
        %v550 = vpop.permute.xlu0 %549
        %vm551 = vcmp.lt.s32.totalorder %v448, 127
        %v552 = vsel %vm551, %v548, %v550
        %v553 = vsel %vm551, %v550, %v548
        %s554 = scalar_lea.vmem [#allocation7], 5
        %v555 = vld [vmem:[%s554] ss:$8 sm:$0x3]
        %v557 = vlaneseq
        %v558 = vshrl.u32 %v557, 7
        %v559 = vsub.s32 0, %v558
        %v560 = vrot.slane %v555, %v559
        %v561 = vlaneseq
        %v562 = vshrl.u32 %v561, 7
        %v563 = vsub.s32 1, %v562
        %v564 = vrot.slane %v555, %v563
        %v567 = vmul.f32 %v552, %v560
        %v568 = vmul.f32 %v553, %v564
        %569 = vrot.lane.b32.xlu0 %v441, 113
        %v570 = vpop.permute.xlu0 %569
        %571 = vrot.lane.b32.xlu0 %v442, 113
        %v572 = vpop.permute.xlu0 %571
        %vm573 = vcmp.lt.s32.totalorder %v448, 113
        %v574 = vsel %vm573, %v570, %v572
        %v575 = vsel %vm573, %v572, %v570
        %s576 = scalar_lea.vmem [#allocation7], 6
        %v577 = vld [vmem:[%s576] ss:$8 sm:$0x3]
        %v579 = vlaneseq
        %v580 = vshrl.u32 %v579, 7
        %v581 = vsub.s32 0, %v580
        %v582 = vrot.slane %v577, %v581
        %v583 = vlaneseq
        %v584 = vshrl.u32 %v583, 7
        %v585 = vsub.s32 1, %v584
        %v586 = vrot.slane %v577, %v585
        %v589 = vmul.f32 %v574, %v582
        %v590 = vmul.f32 %v575, %v586
        %591 = vrot.lane.b32.xlu0 %v441, 112
        %v592 = vpop.permute.xlu0 %591
        %593 = vrot.lane.b32.xlu0 %v442, 112
        %v594 = vpop.permute.xlu0 %593
        %vm595 = vcmp.lt.s32.totalorder %v448, 112
        %v596 = vsel %vm595, %v592, %v594
        %v597 = vsel %vm595, %v594, %v592
        %s598 = scalar_lea.vmem [#allocation7], 7
        %v599 = vld [vmem:[%s598] ss:$8 sm:$0x3]
        %v601 = vlaneseq
        %v602 = vshrl.u32 %v601, 7
        %v603 = vsub.s32 0, %v602
        %v604 = vrot.slane %v599, %v603
        %v605 = vlaneseq
        %v606 = vshrl.u32 %v605, 7
        %v607 = vsub.s32 1, %v606
        %v608 = vrot.slane %v599, %v607
        %v611 = vmul.f32 %v596, %v604
        %v612 = vmul.f32 %v597, %v608
        %613 = vrot.lane.b32.xlu0 %v441, 111
        %v614 = vpop.permute.xlu0 %613
        %615 = vrot.lane.b32.xlu0 %v442, 111
        %v616 = vpop.permute.xlu0 %615
        %vm617 = vcmp.lt.s32.totalorder %v448, 111
        %v618 = vsel %vm617, %v614, %v616
        %v619 = vsel %vm617, %v616, %v614
        %s620 = scalar_lea.vmem [#allocation7], 16
        %v621 = vld [vmem:[%s620] ss:$8 sm:$0x3]
        %v623 = vlaneseq
        %v624 = vshrl.u32 %v623, 7
        %v625 = vsub.s32 0, %v624
        %v626 = vrot.slane %v621, %v625
        %v627 = vlaneseq
        %v628 = vshrl.u32 %v627, 7
        %v629 = vsub.s32 1, %v628
        %v630 = vrot.slane %v621, %v629
        %v633 = vmul.f32 %v618, %v626
        %v634 = vmul.f32 %v619, %v630
        %v635 = vld [vmem:[%s5] sm:$0xf]
        %v636 = vld [vmem:[%s6] sm:$0xf]
        %638 = vset.pattern.permute.xlu0 0
        %639 = vperm.xlu0 %638, %v636
        %v640 = vpop.permute.xlu0 %639
        %vm642 = vcmask 588800
        %v644 = vsel %vm642, %v635, 0
        %646 = vmatprep.subr.mxu0 0.0
        %647 = vmatpush1.msra.mxu0 0.0
        %648 = vmatprep.subr.mxu0 0.0
        %649 = vmatpush1.msra.mxu0 0.0
        %650 = vmatprep.subr.mxu0 0.0
        %651 = vmatpush1.msra.mxu0 0.0
        %652 = vmatprep.subr.mxu0 0.0
        %653 = vmatpush1.msra.mxu0 0.0
        %654 = vmatprep.subr.mxu0 0.0
        %655 = vmatpush1.msra.mxu0 0.0
        %656 = vmatprep.subr.mxu0 0.0
        %657 = vmatpush1.msra.mxu0 0.0
        %658 = vmatprep.subr.mxu0 0.0
        %659 = vmatpush1.msra.mxu0 0.0
        %660 = vmatprep.subr.mxu0 %v634
        %661 = vmatpush1.msra.mxu0 %v633
        %662 = vmatprep.subr.mxu0 %v612
        %663 = vmatpush1.msra.mxu0 %v611
        %664 = vmatprep.subr.mxu0 %v590
        %665 = vmatpush1.msra.mxu0 %v589
        %666 = vmatprep.subr.mxu0 %v568
        %667 = vmatpush1.msra.mxu0 %v567
        %668 = vmatprep.subr.mxu0 %v546
        %669 = vmatpush1.msra.mxu0 %v545
        %670 = vmatprep.subr.mxu0 %v531
        %671 = vmatpush1.msra.mxu0 %v530
        %672 = vmatprep.subr.mxu0 %v509
        %673 = vmatpush1.msra.mxu0 %v508
        %674 = vmatprep.subr.mxu0 %v487
        %675 = vmatpush1.msra.mxu0 %v486
        %676 = vmatprep.subr.mxu0 %v465
        %677 = vmatpush1.msra.mxu0 %v464
        %678 = vmatprep.subr.mxu0 0.0
        %679 = vmatpush2.msra.mxu0 0.0
        %680 = vmatprep.subr.mxu0 0.0
        %681 = vmatpush2.msra.mxu0 0.0
        %682 = vmatprep.subr.mxu0 0.0
        %683 = vmatpush2.msra.mxu0 0.0
        %684 = vmatprep.subr.mxu0 0.0
        %685 = vmatpush2.msra.mxu0 0.0
        %686 = vmatprep.subr.mxu0 0.0
        %687 = vmatpush2.msra.mxu0 0.0
        %688 = vmatprep.subr.mxu0 0.0
        %689 = vmatpush2.msra.mxu0 0.0
        %690 = vmatprep.subr.mxu0 0.0
        %691 = vmatpush2.msra.mxu0 0.0
        %692 = vmatprep.subr.mxu0 0.0
        %693 = vmatpush2.msra.mxu0 0.0
        %694 = vmatprep.subr.mxu0 0.0
        %695 = vmatpush2.msra.mxu0 0.0
        %696 = vmatprep.subr.mxu0 0.0
        %697 = vmatpush2.msra.mxu0 0.0
        %698 = vmatprep.subr.mxu0 0.0
        %699 = vmatpush2.msra.mxu0 0.0
        %700 = vmatprep.subr.mxu0 0.0
        %701 = vmatpush2.msra.mxu0 0.0
        %702 = vmatprep.subr.mxu0 0.0
        %703 = vmatpush2.msra.mxu0 0.0
        %704 = vmatprep.subr.mxu0 0.0
        %705 = vmatpush2.msra.mxu0 0.0
        %706 = vmatprep.subr.mxu0 0.0
        %707 = vmatpush2.msra.mxu0 0.0
        %708 = vmatprep.subr.mxu0 0.0
        %709 = vmatpush2.msra.mxu0 0.0
        %710 = vmatprep.mubr.f32.mxu0 0.0
        %711 = vmatmul.mubr.f32.gmra.mxu0 %v644
        %v712 = vpop.f32.mrf.mxu0
        %v713 = vadd.f32 %v640, %v712
        %v714 = vpop.f32.mrf.mxu0
        %v715 = vadd.f32 %v640, %v714
        %716 = vdwg.mxu0
        %v717 = vmax.f32 %v713, 0.0
        %v718 = vmax.f32 %v715, 0.0
        %v721 = vcombine.low %v717, %v718
        %723 = vst [vmem:[%s346] sm:$0xff] %v721
        %s724 = sand.u32 %s192, 1
        %s725 = scalar_lea.sflag [#allocation4], %s724
        %s726 = sand.u32 %s192, 1
        %s727 = smul.addr %s726, 8
        %s728 = scalar_lea.vmem [#allocation8], %s727
        // Predicated region
        $region61: #{tpu_custom_call.1} parent=47 // pred_check
          %p729 = pneg %p202
        $region62: #{tpu_custom_call.1} parent=47 // pred_check_branch
          %731 = sbr.rel (%p729) target = $region64
        $region63: #{tpu_custom_call.1} parent=47 // pred_region
          %s733 = ssub.s32 128, 128
          %734 = vsyncadd %s725, %s733
          %s735 = smul.addr %s27, 2
          %s736 = smul.addr %s735, 64
          %s737 = scalar_lea.hbm %s7, %s736
          %s739 = sshll.u32 %s728, 4
          %s740 = int_to_ptr.vmem [resolvable:$true] %s739
          %742 = dma.vmem_to_hbm [thread:$0]  %s740, 128, %s737, %s725
        $region64: #{tpu_custom_call.1} parent=47 // pred_fallthru
          _
      $region48: #{tpu_custom_call.1} parent=5 // pred_fallthru
        _
      %p743 = scmp.le.s32.totalorder 2, %s22
      // Predicated region
      $region65: #{tpu_custom_call.1} parent=5 // pred_check
        %p744 = pneg %p743
      $region66: #{tpu_custom_call.1} parent=5 // pred_check_branch
        %746 = sbr.rel (%p744) target = $region68
      $region67: #{tpu_custom_call.1} parent=5 // pred_region
        %s747 = ssub.s32 %s22, 2
        // Predicated region
        $region69: #{tpu_custom_call.1} parent=67 // pred_check
          %p748 = pneg %p208
        $region70: #{tpu_custom_call.1} parent=67 // pred_check_branch
          %750 = sbr.rel (%p748) target = $region72
        $region71: #{tpu_custom_call.1} parent=67 // pred_region
          %s751 = sand.u32 %s193, 1
          %s752 = scalar_lea.sflag [#allocation4], %s751
          %s753 = sand.u32 %s193, 1
          %s754 = smul.addr %s753, 8
          %s755 = scalar_lea.vmem [#allocation8], %s754
          %756 = dma.done %s752, 128
        $region72: #{tpu_custom_call.1} parent=67 // pred_fallthru
          _
      $region68: #{tpu_custom_call.1} parent=5 // pred_fallthru
        _
    $region6: #{tpu_custom_call.1} parent=1 // loop_footer
      %s26 = sadd.s32 1, %s22
    $region7: #{tpu_custom_call.1} parent=1 // loop_footer_branch
      %21 = sbr.rel target = $region3
    $region8: #{tpu_custom_call.1} parent=1 // loop_exit
      _
    %757 = vsyncpa [#allocation3], 1
    %s758 = scalar_lea.sflag [#allocation3], 1
    %759 = vsyncpa %s758, 1
    %760 = vsyncpa [#allocation6], 1
    %s761 = scalar_lea.sflag [#allocation6], 1
    %762 = vsyncpa %s761, 1
    %763 = vsyncpa [#allocation4], 1
    %s764 = scalar_lea.sflag [#allocation4], 1
    %765 = vsyncpa %s764, 1

</llo_original>
